<compile_context>
chip_gen: v6e
topology: v6e:2x2x1
jax: 0.10.0
libtpu: 0.0.40
codegen_flags: <defaults>
</compile_context>

<pallas_src>
import math

import jax
import jax.numpy as jnp
from jax.experimental import pallas as pl
from jax.experimental.pallas import tpu as pltpu

_MASK_VALUE = -1e30      # large finite negative (safer than -inf for score math)
_LOG2E = 1.4426950408889634
_VMEM_LIMIT_BYTES = 48 * 1024 * 1024   # > 16/32 MiB scoped defaults, < v7x 64 MiB physical


def _round_up(a, b):
    return (a + b - 1) // b * b


# ---------------------------------------------------------------------------
# Fused QKV projection kernel
# ---------------------------------------------------------------------------
def _qkv_proj_kernel(x_ref, w_ref, q_ref, k_ref, v_ref):
    # x_ref: (1, blk, C); w_ref: (C, 3*Hp) in compute dtype; outputs: (1, blk, Hp).
    x = x_ref[0].astype(w_ref.dtype)       # cast tile in-kernel -> full-rate MXU operands
    qkv = jnp.dot(x, w_ref[...], preferred_element_type=jnp.float32)  # (blk, 3*Hp) f32

    hp = q_ref.shape[-1]
    # Scale (C**-0.5 * log2e) is already folded into the q weight columns.
    q_ref[0] = qkv[:, :hp].astype(q_ref.dtype)
    k_ref[0] = qkv[:, hp:2 * hp].astype(k_ref.dtype)
    v_ref[0] = qkv[:, 2 * hp:].astype(v_ref.dtype)


def _qkv_projection(x_pad, w_qkv, hp, blk, out_dtype):
    B, T_pad, C = x_pad.shape
    out = jax.ShapeDtypeStruct((B, T_pad, hp), out_dtype)
    return pl.pallas_call(
        _qkv_proj_kernel,
        out_shape=(out, out, out),
        grid_spec=pltpu.PrefetchScalarGridSpec(
            num_scalar_prefetch=0,
            grid=(B, T_pad // blk),
            in_specs=[
                pl.BlockSpec((1, blk, C), lambda b, i: (b, i, 0)),
                # Grid-invariant weight block (constant index map).
                # TODO(synk): pipeline_mode=pl.Buffered(1) would drop its 2x
                # double-buffer copy once universally supported.
                pl.BlockSpec((C, 3 * hp), lambda b, i: (0, 0)),
            ],
            out_specs=(
                pl.BlockSpec((1, blk, hp), lambda b, i: (b, i, 0)),
                pl.BlockSpec((1, blk, hp), lambda b, i: (b, i, 0)),
                pl.BlockSpec((1, blk, hp), lambda b, i: (b, i, 0)),
            ),
        ),
        compiler_params=pltpu.CompilerParams(
            dimension_semantics=("parallel", "parallel"),
            vmem_limit_bytes=_VMEM_LIMIT_BYTES),
    )(x_pad, w_qkv)


# ---------------------------------------------------------------------------
# Flash-attention (online softmax, causal) kernel
# ---------------------------------------------------------------------------
def _flash_attention(q, k, v, blk_q, blk_k, out_dtype):
    B, T_pad, hp = q.shape
    n_q = T_pad // blk_q
    n_k = T_pad // blk_k

    def kv_index(b, qi, ki):
        # Clamp to the last kv tile that contains any causally-visible column
        # for this q tile: steps above the diagonal keep the previous block
        # index, so Pallas issues no DMA for them.
        last_k = ((qi + 1) * blk_q - 1) // blk_k
        return (b, jnp.minimum(ki, last_k), 0)

    def kernel(q_ref, k_ref, v_ref, o_ref, m_ref, l_ref, acc_ref):
        qi = pl.program_id(1)
        ki = pl.program_id(2)
        q_start = qi * blk_q
        k_start = ki * blk_k
        last_k = (q_start + blk_q - 1) // blk_k   # last contributing kv tile

        @pl.when(ki == 0)
        def _init():
            m_ref[...] = jnp.full_like(m_ref, _MASK_VALUE)
            l_ref[...] = jnp.zeros_like(l_ref)
            acc_ref[...] = jnp.zeros_like(acc_ref)

        def _compute(apply_causal_mask):
            q_t = q_ref[0]                    # (blk_q, Hp), pre-scaled by C**-0.5 * log2e
            k_t = k_ref[0]                    # (blk_k, Hp)
            # q @ k^T without materializing k.T: contract the last dims.
            s = jax.lax.dot_general(
                q_t, k_t, (((1,), (1,)), ((), ())),
                preferred_element_type=jnp.float32)            # (blk_q, blk_k) f32

            if apply_causal_mask:
                row = q_start + jax.lax.broadcasted_iota(jnp.int32, s.shape, 0)
                col = k_start + jax.lax.broadcasted_iota(jnp.int32, s.shape, 1)
                s = jnp.where(row >= col, s, _MASK_VALUE)
            # TODO(synk): optional user `mask` argument (mask==0 -> -inf) not
            # plumbed; only the mask=None path of the PyTorch forward exists.

            m_prev = m_ref[...]                                          # (blk_q, 1)
            m_new = jnp.maximum(m_prev, jnp.max(s, axis=-1, keepdims=True))
            alpha = jnp.exp2(m_prev - m_new)       # exp2: log2e folded into q scale
            p = jnp.exp2(s - m_new)                                      # (blk_q, blk_k)
            l_ref[...] = alpha * l_ref[...] + jnp.sum(p, axis=-1, keepdims=True)
            pv = jnp.dot(p.astype(v_ref.dtype), v_ref[0],
                         preferred_element_type=jnp.float32)             # (blk_q, Hp)
            acc_ref[...] = alpha * acc_ref[...] + pv
            m_ref[...] = m_new

        # Causal schedule on ELEMENT offsets (valid for blk_q != blk_k):
        #   fully-below-diagonal blocks: no mask; straddling blocks: masked;
        #   fully-above blocks: skipped (and never fetched, see kv_index).
        needed = k_start <= q_start + (blk_q - 1)
        straddles = k_start + (blk_k - 1) > q_start

        @pl.when(jnp.logical_and(needed, jnp.logical_not(straddles)))
        def _full_block():
            _compute(apply_causal_mask=False)

        @pl.when(jnp.logical_and(needed, straddles))
        def _diag_block():
            _compute(apply_causal_mask=True)

        # Finalize on the last contributing kv tile (the diagonal), not n_k-1.
        @pl.when(ki == last_k)
        def _finalize():
            inv_l = pl.reciprocal(l_ref[...], approx=False)   # exact; once per q tile
            o_ref[0] = (acc_ref[...] * inv_l).astype(o_ref.dtype)   # lane-dense store

    return pl.pallas_call(
        kernel,
        out_shape=jax.ShapeDtypeStruct((B, T_pad, hp), out_dtype),
        grid_spec=pltpu.PrefetchScalarGridSpec(
            num_scalar_prefetch=0,
            grid=(B, n_q, n_k),
            in_specs=[
                pl.BlockSpec((1, blk_q, hp), lambda b, qi, ki: (b, qi, 0)),
                pl.BlockSpec((1, blk_k, hp), kv_index),
                pl.BlockSpec((1, blk_k, hp), kv_index),
            ],
            out_specs=pl.BlockSpec((1, blk_q, hp), lambda b, qi, ki: (b, qi, 0)),
            scratch_shapes=[
                pltpu.VMEM((blk_q, 1), jnp.float32),    # running max
                pltpu.VMEM((blk_q, 1), jnp.float32),    # running denom
                pltpu.VMEM((blk_q, hp), jnp.float32),   # output accumulator
            ],
        ),
        compiler_params=pltpu.CompilerParams(
            dimension_semantics=("parallel", "parallel", "arbitrary"),
            vmem_limit_bytes=_VMEM_LIMIT_BYTES),
    )(q, k, v)


# ---------------------------------------------------------------------------
# Public wrapper
# ---------------------------------------------------------------------------
def attention_head(x, wq, wk, wv, *, compute_dtype=jnp.bfloat16,
                   blk_q=None, blk_k=None):
    """x: (B, T, C); wq/wk/wv: (C, H) (transposed nn.Linear weights). Returns (B, T, H)."""
    B, T, C = x.shape
    H = wq.shape[1]

    hp = _round_up(H, 128)                            # lane-dense head dim
    sub = 16 if jnp.dtype(compute_dtype).itemsize < 4 else 8   # bf16 sublane tile is 16
    if blk_q is None:
        blk_q = min(256, _round_up(T, sub))           # 256 fills v6e/v7x's 256x256 MXU
    if blk_k is None:
        blk_k = min(256, _round_up(T, sub))           # (use 128 on v5e if MXU-bound)
    T_pad = _round_up(T, math.lcm(blk_q, blk_k))

    # Padded queries are sliced off below; padded keys are future positions for
    # every real query, so the causal mask removes them (zero rows stay benign).
    if T_pad != T:
        x = jnp.pad(x, ((0, 0), (0, T_pad - T), (0, 0)))

    # Fuse + zero-pad the weights to (C, 3*Hp): zero q/k columns leave q@k^T
    # unchanged; zero v columns only pad output columns that are sliced off.
    # The score scale C**-0.5 (module uses n_embd, matching the spec) and
    # log2(e) (so the kernel can use exp2) are folded into the q columns once.
    scale = (C ** -0.5) * _LOG2E
    pad_w = lambda w: jnp.pad(w, ((0, 0), (0, hp - H)))
    w_qkv = jnp.concatenate(
        [pad_w(wq) * scale, pad_w(wk), pad_w(wv)], axis=1).astype(compute_dtype)

    q, k, v = _qkv_projection(x, w_qkv, hp, blk_q, compute_dtype)
    o = _flash_attention(q, k, v, blk_q, blk_k, x.dtype)
    return o[:, :T, :H]


def _reference(x, wq, wk, wv):
    # Pure-JAX reference mirroring the PyTorch forward (mask=None path).
    B, T, C = x.shape
    q = x @ wq
    k = x @ wk
    v = x @ wv
    att = jnp.einsum("bth,bsh->bts", q, k) * (C ** -0.5)
    tril = jnp.tril(jnp.ones((T, T)))
    att = jnp.where(tril == 0, -jnp.inf, att)
    att = jax.nn.softmax(att, axis=-1)
    return jnp.einsum("bts,bsh->bth", att, v)


if __name__ == "__main__":
    # config: n_embd=32, n_head=4 -> head_size=8; block_size >= T
    B, T, C = 2, 8, 32
    n_head = 4
    H = C // n_head

    key = jax.random.PRNGKey(0)
    kx, kq, kk, kw = jax.random.split(key, 4)
    x = jax.random.normal(kx, (B, T, C), dtype=jnp.float32)
    # nn.Linear weights are (H, C); keep them transposed as (C, H) for the kernel.
    wq = (jax.random.normal(kq, (H, C), dtype=jnp.float32) * (C ** -0.5)).T
    wk = (jax.random.normal(kk, (H, C), dtype=jnp.float32) * (C ** -0.5)).T
    wv = (jax.random.normal(kw, (H, C), dtype=jnp.float32) * (C ** -0.5)).T

    y_ref = _reference(x, wq, wk, wv)

    # Exact-precision path (f32 operands): tight tolerance vs. the reference.
    y32 = jax.block_until_ready(
        attention_head(x, wq, wk, wv, compute_dtype=jnp.float32))
    assert y32.shape == (B, T, H)
    assert jnp.allclose(y32, y_ref, atol=2e-3, rtol=2e-3), float(
        jnp.max(jnp.abs(y32 - y_ref)))

    # Default fast path (bf16 MXU operands, f32 accumulation & softmax state):
    # tolerance reflects bf16 operand rounding only.
    y16 = jax.block_until_ready(attention_head(x, wq, wk, wv))
    assert y16.shape == (B, T, H)
    assert jnp.allclose(y16, y_ref, atol=4e-2, rtol=4e-2), float(
        jnp.max(jnp.abs(y16 - y_ref)))

    print("KERNEL_OK")
</pallas_src>

<mosaic_0001>
module attributes {stable_mosaic.version = 11 : i64} {
  func.func @_qkv_proj_kernel(%arg0: i32, %arg1: i32, %arg2: memref<1x8x32xf32, #tpu.memory_space<vmem>>, %arg3: memref<32x384xf32, #tpu.memory_space<vmem>>, %arg4: memref<1x8x128xf32, #tpu.memory_space<vmem>>, %arg5: memref<1x8x128xf32, #tpu.memory_space<vmem>>, %arg6: memref<1x8x128xf32, #tpu.memory_space<vmem>>) attributes {dimension_semantics = [#tpu.dimension_semantics<parallel>, #tpu.dimension_semantics<parallel>], iteration_bounds = array<i64: 2, 1>, scalar_prefetch = 0 : i64, scratch_operands = 0 : i64, tpu.core_type = #tpu.core_type<tc>, window_params = [{transform_indices = @transform_0, window_bounds = array<i64: 1, 8, 32>}, {pipeline_mode = #tpu.pipeline_mode<synchronous>, transform_indices = @transform_1, window_bounds = array<i64: 32, 384>}, {transform_indices = @transform_2, window_bounds = array<i64: 1, 8, 128>}, {transform_indices = @transform_3, window_bounds = array<i64: 1, 8, 128>}, {transform_indices = @transform_4, window_bounds = array<i64: 1, 8, 128>}]} {
    %c0 = arith.constant 0 : index
    %c0_0 = arith.constant 0 : index
    %c0_1 = arith.constant 0 : index
    %0 = vector.load %arg2[%c0, %c0_0, %c0_1] : memref<1x8x32xf32, #tpu.memory_space<vmem>>, vector<1x8x32xf32>
    %1 = vector.shape_cast %0 : vector<1x8x32xf32> to vector<8x32xf32>
    %c0_2 = arith.constant 0 : index
    %c0_3 = arith.constant 0 : index
    %2 = vector.load %arg3[%c0_2, %c0_3] : memref<32x384xf32, #tpu.memory_space<vmem>>, vector<32x384xf32>
    %cst = arith.constant dense<0.000000e+00> : vector<8x384xf32>
    %3 = tpu.matmul %1, %2, %cst {dimension_numbers = #tpu.dot_dimension_numbers<[1], [0], [0], [1], [0, 0, 1, 1], [], []>} : vector<8x32xf32>, vector<32x384xf32>, vector<8x384xf32> -> vector<8x384xf32>
    %4 = vector.extract_strided_slice %3 {offsets = [0, 0], sizes = [8, 128], strides = [1, 1]} : vector<8x384xf32> to vector<8x128xf32>
    %c0_4 = arith.constant 0 : index
    %c0_5 = arith.constant 0 : index
    %c0_6 = arith.constant 0 : index
    %5 = vector.load %arg4[%c0_4, %c0_5, %c0_6] : memref<1x8x128xf32, #tpu.memory_space<vmem>>, vector<1x8x128xf32>
    %6 = vector.shape_cast %5 : vector<1x8x128xf32> to vector<8x128xf32>
    %7 = vector.shape_cast %4 : vector<8x128xf32> to vector<1x8x128xf32>
    tpu.vector_store %arg4[%c0_4, %c0_5, %c0_6], %7 {strides = array<i32>} : memref<1x8x128xf32, #tpu.memory_space<vmem>>, vector<1x8x128xf32>,
    %8 = vector.extract_strided_slice %3 {offsets = [0, 128], sizes = [8, 128], strides = [1, 1]} : vector<8x384xf32> to vector<8x128xf32>
    %c0_7 = arith.constant 0 : index
    %c0_8 = arith.constant 0 : index
    %c0_9 = arith.constant 0 : index
    %9 = vector.load %arg5[%c0_7, %c0_8, %c0_9] : memref<1x8x128xf32, #tpu.memory_space<vmem>>, vector<1x8x128xf32>
    %10 = vector.shape_cast %9 : vector<1x8x128xf32> to vector<8x128xf32>
    %11 = vector.shape_cast %8 : vector<8x128xf32> to vector<1x8x128xf32>
    tpu.vector_store %arg5[%c0_7, %c0_8, %c0_9], %11 {strides = array<i32>} : memref<1x8x128xf32, #tpu.memory_space<vmem>>, vector<1x8x128xf32>,
    %12 = vector.extract_strided_slice %3 {offsets = [0, 256], sizes = [8, 128], strides = [1, 1]} : vector<8x384xf32> to vector<8x128xf32>
    %c0_10 = arith.constant 0 : index
    %c0_11 = arith.constant 0 : index
    %c0_12 = arith.constant 0 : index
    %13 = vector.load %arg6[%c0_10, %c0_11, %c0_12] : memref<1x8x128xf32, #tpu.memory_space<vmem>>, vector<1x8x128xf32>
    %14 = vector.shape_cast %13 : vector<1x8x128xf32> to vector<8x128xf32>
    %15 = vector.shape_cast %12 : vector<8x128xf32> to vector<1x8x128xf32>
    tpu.vector_store %arg6[%c0_10, %c0_11, %c0_12], %15 {strides = array<i32>} : memref<1x8x128xf32, #tpu.memory_space<vmem>>, vector<1x8x128xf32>,
    return
  }
  func.func @transform_0(%arg0: i32, %arg1: i32) -> (i32, i32, i32) {
    %c0_i32 = arith.constant 0 : i32
    %c0_i32_0 = arith.constant 0 : i32
    return %arg0, %arg1, %c0_i32 : i32, i32, i32
  }
  func.func @transform_1(%arg0: i32, %arg1: i32) -> (i32, i32) {
    %c0_i32 = arith.constant 0 : i32
    %c0_i32_0 = arith.constant 0 : i32
    %c0_i32_1 = arith.constant 0 : i32
    return %c0_i32, %c0_i32_0 : i32, i32
  }
  func.func @transform_2(%arg0: i32, %arg1: i32) -> (i32, i32, i32) {
    %c0_i32 = arith.constant 0 : i32
    %c0_i32_0 = arith.constant 0 : i32
    return %arg0, %arg1, %c0_i32 : i32, i32, i32
  }
  func.func @transform_3(%arg0: i32, %arg1: i32) -> (i32, i32, i32) {
    %c0_i32 = arith.constant 0 : i32
    %c0_i32_0 = arith.constant 0 : i32
    return %arg0, %arg1, %c0_i32 : i32, i32, i32
  }
  func.func @transform_4(%arg0: i32, %arg1: i32) -> (i32, i32, i32) {
    %c0_i32 = arith.constant 0 : i32
    %c0_i32_0 = arith.constant 0 : i32
    return %arg0, %arg1, %c0_i32 : i32, i32, i32
  }
}

</mosaic_0001>

<llo_original>
// kernel: tpu_custom_call.1
$region0: #{tpu_custom_call.1}
  #allocation0 [shape = 'u32[]', space=smem, size = 0x4, offset = 0x4, fixed_abs, tag = 'smem constant byte address 0x4 - core index']
  #allocation1 [shape = 'u32[144,128]{1,0:T(1,128)}', space=vmem, size = 0x12000, scoped, tag = 'internal scratch']
  %s0 = inlined_call_operand.hbm [shape: f32[2,8,32], index: 0, kind: input, shape index: {}]
  %s1 = inlined_call_operand.hbm [shape: f32[32,384], index: 1, kind: input, shape index: {}]
  %s2 = inlined_call_operand.hbm [shape: f32[2,8,128], index: 2, kind: output, shape index: {0}]
  %s3 = inlined_call_operand.hbm [shape: f32[2,8,128], index: 3, kind: output, shape index: {1}]
  %s4 = inlined_call_operand.hbm [shape: f32[2,8,128], index: 4, kind: output, shape index: {2}]
  %5 = xla_tuple %s2, %s3, %s4
  %s6 = sld [smem:[#allocation0]]
  $region65: #{tpu_custom_call.1} parent=0
    _
  %s8 = ssub.s32 1, %s6
  %s9 = scalar_select 0, %s8, %s6
  $region1: #{tpu_custom_call.1} parent=0
    #allocation2 [shape = 'u8[8192]{0}', space=vmem, size = 0x2000, scoped, tag = 'input window, operand 0']
    #allocation3 [shape = 's32[2]{0}', space=sflag, size = 0x8, scoped, tag = 'scoped memory for tpu_custom_call.1']
    #allocation4 [shape = 's32[2]{0}', space=sflag, size = 0x8, scoped, tag = 'scoped memory for tpu_custom_call.1']
    #allocation5 [shape = 'u8[49152]{0}', space=vmem, size = 0xc000, scoped, tag = 'input window, operand 1, single buffered']
    #allocation6 [shape = 's32[1]{0}', space=sflag, size = 0x4, scoped, tag = 'scoped memory for tpu_custom_call.1']
    #allocation7 [shape = 'u8[8192]{0}', space=vmem, size = 0x2000, scoped, tag = 'output window, operand 0']
    #allocation8 [shape = 'u8[8192]{0}', space=vmem, size = 0x2000, scoped, tag = 'output window, operand 1']
    #allocation9 [shape = 's32[2]{0}', space=sflag, size = 0x8, scoped, tag = 'scoped memory for tpu_custom_call.1']
    #allocation10 [shape = 'u8[8192]{0}', space=vmem, size = 0x2000, scoped, tag = 'output window, operand 2']
    %10 = vsyncpa [#allocation3], 0
    %s11 = scalar_lea.sflag [#allocation3], 1
    %12 = vsyncpa %s11, 0
    %13 = vsyncpa [#allocation6], 0
    %14 = vsyncpa [#allocation4], 0
    %s15 = scalar_lea.sflag [#allocation4], 1
    %16 = vsyncpa %s15, 0
    %17 = vsyncpa [#allocation9], 0
    %s18 = scalar_lea.sflag [#allocation9], 1
    %19 = vsyncpa %s18, 0
    loop: start=0, step=1, limit=4
    $region2: #{tpu_custom_call.1} parent=1 // loop_pre_header
      _
    $region3: #{tpu_custom_call.1} parent=1 // loop_header
      %s21 = sphi 0, %s25
      %p22 = scmp.ge.s32.totalorder %s21, 4
      %s28 = sphi 0, %s40
      %s29 = sphi 0, %s36
      %s30 = sphi 0, %s28
      %s31 = sphi 0, %s29
      %s32 = sphi 0, %s30
      %s33 = sphi 0, %s31
      %s45 = sphi 0, %s47
      %s48 = sphi 0, %s45
      %s49 = sphi 0, %s48
      %s65 = sphi 0, %s49
      %s69 = sphi 0, %s69
      %s71 = sphi 0, %s69
      %s72 = sphi 0, %s71
      %s86 = sphi 0, %s72
      %s94 = sphi 0, %s96
      %s97 = sphi 0, %s94
      %s98 = sphi 0, %s97
      %s114 = sphi 0, %s98
      %s122 = sphi 0, %s124
      %s125 = sphi 0, %s122
      %s126 = sphi 0, %s125
      %s142 = sphi 0, %s126
      %s150 = sphi 0, %s152
      %s153 = sphi 0, %s150
      %s154 = sphi 0, %s153
      %s170 = sphi 0, %s154
    $region4: #{tpu_custom_call.1} parent=1 // loop_header_branch
      %24 = sbr.rel (%p22) target = $region8
    $region5: #{tpu_custom_call.1} parent=1 // loop_body
      %s26 = ssub.s32 %s21, 1
      %s27 = ssub.s32 %s21, 2
      %s34 = sadd.s32 1, %s29
      %p35 = scmp.ge.s32.totalorder %s34, 1
      %s36 = scalar_select %p35, 0, %s34
      %s37 = sadd.s32 1, %s28
      %s38 = scalar_select %p35, %s37, %s28
      %p39 = scmp.ge.s32.totalorder %s38, 2
      %s40 = scalar_select %p39, 0, %s38
      %s41 = ssub.s32 %s28, %s40
      %s42 = ssub.s32 %s29, %s36
      %s43 = sor.u32 %s41, %s42
      %p44 = scmp.eq.s32.totalorder %s43, 0
      %s46 = sadd.s32 %s45, 1
      %s47 = scalar_select %p44, %s45, %s46
      %p50 = pneg %p44
      %p51 = scmp.eq.s32.totalorder %s21, 1
      %p52 = por %p50, %p51
      %p53 = scmp.ne.s32.totalorder %s45, %s48
      %p54 = scmp.eq.s32.totalorder %s21, 0
      %p55 = por %p53, %p54
      %p56 = scmp.ne.s32.totalorder %s45, %s48
      %p57 = scmp.eq.s32.totalorder %s26, 1
      %p58 = por %p56, %p57
      %p59 = scmp.ne.s32.totalorder %s48, %s49
      %p60 = scmp.eq.s32.totalorder %s26, 0
      %p61 = por %p59, %p60
      %p62 = scmp.ne.s32.totalorder %s48, %s49
      %p63 = scmp.eq.s32.totalorder %s27, 1
      %p64 = por %p62, %p63
      %p66 = scmp.ne.s32.totalorder %s49, %s65
      %p67 = scmp.eq.s32.totalorder %s27, 0
      %p68 = por %p66, %p67
      %s70 = sadd.s32 %s69, 1
      %p73 = scmp.eq.s32.totalorder %s21, 1
      %p74 = scmp.ne.s32.totalorder %s69, %s71
      %p75 = scmp.eq.s32.totalorder %s21, 0
      %p76 = por %p74, %p75
      %p77 = scmp.ne.s32.totalorder %s69, %s71
      %p78 = scmp.eq.s32.totalorder %s26, 1
      %p79 = por %p77, %p78
      %p80 = scmp.ne.s32.totalorder %s71, %s72
      %p81 = scmp.eq.s32.totalorder %s26, 0
      %p82 = por %p80, %p81
      %p83 = scmp.ne.s32.totalorder %s71, %s72
      %p84 = scmp.eq.s32.totalorder %s27, 1
      %p85 = por %p83, %p84
      %p87 = scmp.ne.s32.totalorder %s72, %s86
      %p88 = scmp.eq.s32.totalorder %s27, 0
      %p89 = por %p87, %p88
      %s90 = ssub.s32 %s28, %s40
      %s91 = ssub.s32 %s29, %s36
      %s92 = sor.u32 %s90, %s91
      %p93 = scmp.eq.s32.totalorder %s92, 0
      %s95 = sadd.s32 %s94, 1
      %s96 = scalar_select %p93, %s94, %s95
      %p99 = pneg %p93
      %p100 = scmp.eq.s32.totalorder %s21, 1
      %p101 = por %p99, %p100
      %p102 = scmp.ne.s32.totalorder %s94, %s97
      %p103 = scmp.eq.s32.totalorder %s21, 0
      %p104 = por %p102, %p103
      %p105 = scmp.ne.s32.totalorder %s94, %s97
      %p106 = scmp.eq.s32.totalorder %s26, 1
      %p107 = por %p105, %p106
      %p108 = scmp.ne.s32.totalorder %s97, %s98
      %p109 = scmp.eq.s32.totalorder %s26, 0
      %p110 = por %p108, %p109
      %p111 = scmp.ne.s32.totalorder %s97, %s98
      %p112 = scmp.eq.s32.totalorder %s27, 1
      %p113 = por %p111, %p112
      %p115 = scmp.ne.s32.totalorder %s98, %s114
      %p116 = scmp.eq.s32.totalorder %s27, 0
      %p117 = por %p115, %p116
      %s118 = ssub.s32 %s28, %s40
      %s119 = ssub.s32 %s29, %s36
      %s120 = sor.u32 %s118, %s119
      %p121 = scmp.eq.s32.totalorder %s120, 0
      %s123 = sadd.s32 %s122, 1
      %s124 = scalar_select %p121, %s122, %s123
      %p127 = pneg %p121
      %p128 = scmp.eq.s32.totalorder %s21, 1
      %p129 = por %p127, %p128
      %p130 = scmp.ne.s32.totalorder %s122, %s125
      %p131 = scmp.eq.s32.totalorder %s21, 0
      %p132 = por %p130, %p131
      %p133 = scmp.ne.s32.totalorder %s122, %s125
      %p134 = scmp.eq.s32.totalorder %s26, 1
      %p135 = por %p133, %p134
      %p136 = scmp.ne.s32.totalorder %s125, %s126
      %p137 = scmp.eq.s32.totalorder %s26, 0
      %p138 = por %p136, %p137
      %p139 = scmp.ne.s32.totalorder %s125, %s126
      %p140 = scmp.eq.s32.totalorder %s27, 1
      %p141 = por %p139, %p140
      %p143 = scmp.ne.s32.totalorder %s126, %s142
      %p144 = scmp.eq.s32.totalorder %s27, 0
      %p145 = por %p143, %p144
      %s146 = ssub.s32 %s28, %s40
      %s147 = ssub.s32 %s29, %s36
      %s148 = sor.u32 %s146, %s147
      %p149 = scmp.eq.s32.totalorder %s148, 0
      %s151 = sadd.s32 %s150, 1
      %s152 = scalar_select %p149, %s150, %s151
      %p155 = pneg %p149
      %p156 = scmp.eq.s32.totalorder %s21, 1
      %p157 = por %p155, %p156
      %p158 = scmp.ne.s32.totalorder %s150, %s153
      %p159 = scmp.eq.s32.totalorder %s21, 0
      %p160 = por %p158, %p159
      %p161 = scmp.ne.s32.totalorder %s150, %s153
      %p162 = scmp.eq.s32.totalorder %s26, 1
      %p163 = por %p161, %p162
      %p164 = scmp.ne.s32.totalorder %s153, %s154
      %p165 = scmp.eq.s32.totalorder %s26, 0
      %p166 = por %p164, %p165
      %p167 = scmp.ne.s32.totalorder %s153, %s154
      %p168 = scmp.eq.s32.totalorder %s27, 1
      %p169 = por %p167, %p168
      %p171 = scmp.ne.s32.totalorder %s154, %s170
      %p172 = scmp.eq.s32.totalorder %s27, 0
      %p173 = por %p171, %p172
      %p174 = scmp.le.s32.totalorder 1, %s21
      %p175 = scmp.lt.s32.totalorder %s21, 3
      %p176 = pnand %p174, %p175
      %p177 = pneg %p176
      // Predicated region
      $region9: #{tpu_custom_call.1} parent=5 // pred_check
        _
      $region10: #{tpu_custom_call.1} parent=5 // pred_check_branch
        %179 = sbr.rel (%p176) target = $region12
      $region11: #{tpu_custom_call.1} parent=5 // pred_region
        %s180 = ssub.s32 %s21, 1
        // Predicated region
        $region13: #{tpu_custom_call.1} parent=11 // pred_check
          %p181 = pneg %p82
        $region14: #{tpu_custom_call.1} parent=11 // pred_check_branch
          %183 = sbr.rel (%p181) target = $region16
        $region15: #{tpu_custom_call.1} parent=11 // pred_region
          %s185 = ssub.s32 1536, 1536
          %186 = vsyncadd [#allocation6], %s185
          %s187 = sshll.u32 [#allocation5], 4
          %s188 = int_to_ptr.vmem [resolvable:$true] %s187
          %193 = dma.hbm_to_vmem [thread:$0]  %s1, 1536, %s188, [#allocation6], 384, 384, 24
        $region16: #{tpu_custom_call.1} parent=11 // pred_fallthru
          _
      $region12: #{tpu_custom_call.1} parent=5 // pred_fallthru
        _
      %p194 = scmp.lt.s32.totalorder %s21, 2
      // Predicated region
      $region17: #{tpu_custom_call.1} parent=5 // pred_check
        %p195 = pneg %p194
      $region18: #{tpu_custom_call.1} parent=5 // pred_check_branch
        %197 = sbr.rel (%p195) target = $region20
      $region19: #{tpu_custom_call.1} parent=5 // pred_region
        // Predicated region
        $region21: #{tpu_custom_call.1} parent=19 // pred_check
          %p198 = pneg %p55
        $region22: #{tpu_custom_call.1} parent=19 // pred_check_branch
          %200 = sbr.rel (%p198) target = $region24
        $region23: #{tpu_custom_call.1} parent=19 // pred_region
          %s201 = sand.u32 %s45, 1
          %s202 = scalar_lea.sflag [#allocation3], %s201
          %s203 = sand.u32 %s45, 1
          %s204 = smul.addr %s203, 8
          %s205 = scalar_lea.vmem [#allocation2], %s204
          %s207 = ssub.s32 128, 128
          %208 = vsyncadd %s202, %s207
          %s209 = sadd.s32 %s29, %s28
          %s210 = smul.addr %s209, 128
          %s211 = scalar_lea.hbm %s0, %s210
          %s213 = sshll.u32 %s205, 4
          %s214 = int_to_ptr.vmem [resolvable:$true] %s213
          %216 = dma.hbm_to_vmem [thread:$0]  %s211, 128, %s214, %s202
        $region24: #{tpu_custom_call.1} parent=19 // pred_fallthru
          _
      $region20: #{tpu_custom_call.1} parent=5 // pred_fallthru
        _
      %p217 = scmp.le.s32.totalorder 1, %s21
      %p218 = scmp.lt.s32.totalorder %s21, 3
      %p219 = pnand %p217, %p218
      %p220 = pneg %p219
      // Predicated region
      $region25: #{tpu_custom_call.1} parent=5 // pred_check
        _
      $region26: #{tpu_custom_call.1} parent=5 // pred_check_branch
        %222 = sbr.rel (%p219) target = $region28
      $region27: #{tpu_custom_call.1} parent=5 // pred_region
        %s223 = ssub.s32 %s21, 1
        %s224 = sand.u32 %s48, 1
        %s225 = scalar_lea.sflag [#allocation3], %s224
        %s226 = sand.u32 %s48, 1
        %s227 = smul.addr %s226, 8
        %s228 = scalar_lea.vmem [#allocation2], %s227
        // Predicated region
        $region29: #{tpu_custom_call.1} parent=27 // pred_check
          %p229 = pneg %p61
        $region30: #{tpu_custom_call.1} parent=27 // pred_check_branch
          %231 = sbr.rel (%p229) target = $region32
        $region31: #{tpu_custom_call.1} parent=27 // pred_region
          %232 = dma.done %s225, 128
        $region32: #{tpu_custom_call.1} parent=27 // pred_fallthru
          _
        // Predicated region
        $region33: #{tpu_custom_call.1} parent=27 // pred_check
          %p233 = pneg %p82
        $region34: #{tpu_custom_call.1} parent=27 // pred_check_branch
          %235 = sbr.rel (%p233) target = $region36
        $region35: #{tpu_custom_call.1} parent=27 // pred_region
          %236 = dma.done [#allocation6], 1536
        $region36: #{tpu_custom_call.1} parent=27 // pred_fallthru
          _
        %s237 = sand.u32 %s48, 1
        %s238 = scalar_lea.sflag [#allocation3], %s237
        %s239 = sand.u32 %s48, 1
        %s240 = smul.addr %s239, 8
        %s241 = scalar_lea.vmem [#allocation2], %s240
        %p242 = pneg %p61
        %p243 = pneg %p58
        %p244 = pneg %p82
        %p245 = pneg %p79
        %p246 = pneg %p110
        %p247 = pneg %p107
        %s248 = sand.u32 %s97, 1
        %s249 = scalar_lea.sflag [#allocation4], %s248
        %s250 = sand.u32 %s97, 1
        %s251 = smul.addr %s250, 8
        %s252 = scalar_lea.vmem [#allocation7], %s251
        %p253 = pneg %p138
        %p254 = pneg %p135
        %s255 = sand.u32 %s26, 1
        %s256 = scalar_lea.sflag [#allocation9], %s255
        %s257 = sand.u32 %s125, 1
        %s258 = smul.addr %s257, 8
        %s259 = scalar_lea.vmem [#allocation8], %s258
        %p260 = pneg %p166
        %p261 = pneg %p163
        %s262 = sand.u32 %s26, 1
        %s263 = scalar_lea.sflag [#allocation9], %s262
        %s264 = sand.u32 %s153, 1
        %s265 = smul.addr %s264, 8
        %s266 = scalar_lea.vmem [#allocation10], %s265
        %v267 = vld [vmem:[%s228] sm:$0xff]
        %v268 = vld [vmem:[#allocation5] sm:$0xff]
        %v269 = vld [vmem:[#allocation5 + $0x8] sm:$0xff]
        %v270 = vld [vmem:[#allocation5 + $0x10] sm:$0xff]
        %v271 = vld [vmem:[#allocation5 + $0x18] sm:$0xff]
        %v272 = vld [vmem:[#allocation5 + $0x20] sm:$0xff]
        %v273 = vld [vmem:[#allocation5 + $0x28] sm:$0xff]
        %v274 = vld [vmem:[#allocation5 + $0x30] sm:$0xff]
        %v275 = vld [vmem:[#allocation5 + $0x38] sm:$0xff]
        %v276 = vld [vmem:[#allocation5 + $0x40] sm:$0xff]
        %v277 = vld [vmem:[#allocation5 + $0x48] sm:$0xff]
        %v278 = vld [vmem:[#allocation5 + $0x50] sm:$0xff]
        %v279 = vld [vmem:[#allocation5 + $0x58] sm:$0xff]
        %vm280 = vcmask 261120
        %v282 = vsel %vm280, %v267, 0
        %284 = vmatprep.subr.mxu0 0.0
        %285 = vmatpush1.msra.mxu0 0.0
        %286 = vmatprep.subr.mxu0 0.0
        %287 = vmatpush1.msra.mxu0 0.0
        %288 = vmatprep.subr.mxu0 0.0
        %289 = vmatpush1.msra.mxu0 0.0
        %290 = vmatprep.subr.mxu0 0.0
        %291 = vmatpush1.msra.mxu0 0.0
        %292 = vmatprep.subr.mxu0 0.0
        %293 = vmatpush1.msra.mxu0 0.0
        %294 = vmatprep.subr.mxu0 0.0
        %295 = vmatpush1.msra.mxu0 0.0
        %296 = vmatprep.subr.mxu0 0.0
        %297 = vmatpush1.msra.mxu0 0.0
        %298 = vmatprep.subr.mxu0 0.0
        %299 = vmatpush1.msra.mxu0 0.0
        %300 = vmatprep.subr.mxu0 0.0
        %301 = vmatpush1.msra.mxu0 0.0
        %302 = vmatprep.subr.mxu0 0.0
        %303 = vmatpush1.msra.mxu0 0.0
        %304 = vmatprep.subr.mxu0 0.0
        %305 = vmatpush1.msra.mxu0 0.0
        %306 = vmatprep.subr.mxu0 0.0
        %307 = vmatpush1.msra.mxu0 0.0
        %308 = vmatprep.subr.mxu0 %v278
        %309 = vmatpush1.msra.mxu0 %v277
        %310 = vmatprep.subr.mxu0 %v275
        %311 = vmatpush1.msra.mxu0 %v274
        %312 = vmatprep.subr.mxu0 %v272
        %313 = vmatpush1.msra.mxu0 %v271
        %314 = vmatprep.subr.mxu0 %v269
        %315 = vmatpush1.msra.mxu0 %v268
        %316 = vmatprep.subr.mxu0 0.0
        %317 = vmatpush2.msra.mxu0 0.0
        %318 = vmatprep.subr.mxu0 0.0
        %319 = vmatpush2.msra.mxu0 0.0
        %320 = vmatprep.subr.mxu0 0.0
        %321 = vmatpush2.msra.mxu0 0.0
        %322 = vmatprep.subr.mxu0 0.0
        %323 = vmatpush2.msra.mxu0 0.0
        %324 = vmatprep.subr.mxu0 0.0
        %325 = vmatpush2.msra.mxu0 0.0
        %326 = vmatprep.subr.mxu0 0.0
        %327 = vmatpush2.msra.mxu0 0.0
        %328 = vmatprep.subr.mxu0 0.0
        %329 = vmatpush2.msra.mxu0 0.0
        %330 = vmatprep.subr.mxu0 0.0
        %331 = vmatpush2.msra.mxu0 0.0
        %332 = vmatprep.subr.mxu0 0.0
        %333 = vmatpush2.msra.mxu0 0.0
        %334 = vmatprep.subr.mxu0 0.0
        %335 = vmatpush2.msra.mxu0 0.0
        %336 = vmatprep.subr.mxu0 0.0
        %337 = vmatpush2.msra.mxu0 0.0
        %338 = vmatprep.subr.mxu0 0.0
        %339 = vmatpush2.msra.mxu0 0.0
        %340 = vmatprep.subr.mxu0 0.0
        %341 = vmatpush2.msra.mxu0 0.0
        %342 = vmatprep.subr.mxu0 0.0
        %343 = vmatpush2.msra.mxu0 0.0
        %344 = vmatprep.subr.mxu0 0.0
        %345 = vmatpush2.msra.mxu0 0.0
        %346 = vmatprep.subr.mxu0 0.0
        %347 = vmatpush2.msra.mxu0 0.0
        %348 = vmatprep.mubr.f32.mxu0 0.0
        %349 = vmatmul.mubr.f32.gmra.mxu0 %v282
        %v350 = vpop.f32.mrf.mxu0
        %v351 = vadd.f32 0.0, %v350
        %v352 = vpop.f32.mrf.mxu0
        %v353 = vadd.f32 0.0, %v352
        %354 = vdwg.mxu0
        %355 = vmatprep.subr.mxu0 0.0
        %356 = vmatpush1.msra.mxu0 0.0
        %357 = vmatprep.subr.mxu0 0.0
        %358 = vmatpush1.msra.mxu0 0.0
        %359 = vmatprep.subr.mxu0 0.0
        %360 = vmatpush1.msra.mxu0 0.0
        %361 = vmatprep.subr.mxu0 0.0
        %362 = vmatpush1.msra.mxu0 0.0
        %363 = vmatprep.subr.mxu0 0.0
        %364 = vmatpush1.msra.mxu0 0.0
        %365 = vmatprep.subr.mxu0 0.0
        %366 = vmatpush1.msra.mxu0 0.0
        %367 = vmatprep.subr.mxu0 0.0
        %368 = vmatpush1.msra.mxu0 0.0
        %369 = vmatprep.subr.mxu0 0.0
        %370 = vmatpush1.msra.mxu0 0.0
        %371 = vmatprep.subr.mxu0 0.0
        %372 = vmatpush1.msra.mxu0 0.0
        %373 = vmatprep.subr.mxu0 0.0
        %374 = vmatpush1.msra.mxu0 0.0
        %375 = vmatprep.subr.mxu0 0.0
        %376 = vmatpush1.msra.mxu0 0.0
        %377 = vmatprep.subr.mxu0 0.0
        %378 = vmatpush1.msra.mxu0 0.0
        %379 = vmatprep.subr.mxu0 0.0
        %380 = vmatpush1.msra.mxu0 %v279
        %381 = vmatprep.subr.mxu0 0.0
        %382 = vmatpush1.msra.mxu0 %v276
        %383 = vmatprep.subr.mxu0 0.0
        %384 = vmatpush1.msra.mxu0 %v273
        %385 = vmatprep.subr.mxu0 0.0
        %386 = vmatpush1.msra.mxu0 %v270
        %387 = vmatprep.subr.mxu0 0.0
        %388 = vmatpush2.msra.mxu0 0.0
        %389 = vmatprep.subr.mxu0 0.0
        %390 = vmatpush2.msra.mxu0 0.0
        %391 = vmatprep.subr.mxu0 0.0
        %392 = vmatpush2.msra.mxu0 0.0
        %393 = vmatprep.subr.mxu0 0.0
        %394 = vmatpush2.msra.mxu0 0.0
        %395 = vmatprep.subr.mxu0 0.0
        %396 = vmatpush2.msra.mxu0 0.0
        %397 = vmatprep.subr.mxu0 0.0
        %398 = vmatpush2.msra.mxu0 0.0
        %399 = vmatprep.subr.mxu0 0.0
        %400 = vmatpush2.msra.mxu0 0.0
        %401 = vmatprep.subr.mxu0 0.0
        %402 = vmatpush2.msra.mxu0 0.0
        %403 = vmatprep.subr.mxu0 0.0
        %404 = vmatpush2.msra.mxu0 0.0
        %405 = vmatprep.subr.mxu0 0.0
        %406 = vmatpush2.msra.mxu0 0.0
        %407 = vmatprep.subr.mxu0 0.0
        %408 = vmatpush2.msra.mxu0 0.0
        %409 = vmatprep.subr.mxu0 0.0
        %410 = vmatpush2.msra.mxu0 0.0
        %411 = vmatprep.subr.mxu0 0.0
        %412 = vmatpush2.msra.mxu0 0.0
        %413 = vmatprep.subr.mxu0 0.0
        %414 = vmatpush2.msra.mxu0 0.0
        %415 = vmatprep.subr.mxu0 0.0
        %416 = vmatpush2.msra.mxu0 0.0
        %417 = vmatprep.subr.mxu0 0.0
        %418 = vmatpush2.msra.mxu0 0.0
        %419 = vmatprep.mubr.f32.mxu0 0.0
        %420 = vmatmul.mubr.f32.gmra.mxu0 %v282
        %v421 = vpop.f32.mrf.mxu0
        %v422 = vadd.f32 0.0, %v421
        %v423 = vpop.f32.mrf.mxu0
        %424 = vdwg.mxu0
        %425 = vst [vmem:[%s252] sm:$0xff] %v351
        %426 = vst [vmem:[%s259] sm:$0xff] %v353
        %427 = vst [vmem:[%s266] sm:$0xff] %v422
        %s428 = sand.u32 %s97, 1
        %s429 = scalar_lea.sflag [#allocation4], %s428
        %s430 = sand.u32 %s97, 1
        %s431 = smul.addr %s430, 8
        %s432 = scalar_lea.vmem [#allocation7], %s431
        %s433 = sand.u32 %s26, 1
        %s434 = scalar_lea.sflag [#allocation9], %s433
        %s435 = sand.u32 %s125, 1
        %s436 = smul.addr %s435, 8
        %s437 = scalar_lea.vmem [#allocation8], %s436
        %s438 = sand.u32 %s26, 1
        %s439 = scalar_lea.sflag [#allocation9], %s438
        %s440 = sand.u32 %s153, 1
        %s441 = smul.addr %s440, 8
        %s442 = scalar_lea.vmem [#allocation10], %s441
        // Predicated region
        $region37: #{tpu_custom_call.1} parent=27 // pred_check
          %p443 = pneg %p107
        $region38: #{tpu_custom_call.1} parent=27 // pred_check_branch
          %445 = sbr.rel (%p443) target = $region40
        $region39: #{tpu_custom_call.1} parent=27 // pred_region
          %s447 = ssub.s32 128, 128
          %448 = vsyncadd %s429, %s447
          %s449 = sadd.s32 %s31, %s30
          %s450 = smul.addr %s449, 128
          %s451 = scalar_lea.hbm %s2, %s450
          %s453 = sshll.u32 %s432, 4
          %s454 = int_to_ptr.vmem [resolvable:$true] %s453
          %456 = dma.vmem_to_hbm [thread:$0]  %s454, 128, %s451, %s429
        $region40: #{tpu_custom_call.1} parent=27 // pred_fallthru
          _
        // Predicated region
        $region41: #{tpu_custom_call.1} parent=27 // pred_check
          %p457 = pneg %p135
        $region42: #{tpu_custom_call.1} parent=27 // pred_check_branch
          %459 = sbr.rel (%p457) target = $region44
        $region43: #{tpu_custom_call.1} parent=27 // pred_region
          %s461 = ssub.s32 128, 128
          %462 = vsyncadd %s434, %s461
          %s463 = sadd.s32 %s31, %s30
          %s464 = smul.addr %s463, 128
          %s465 = scalar_lea.hbm %s3, %s464
          %s467 = sshll.u32 %s437, 4
          %s468 = int_to_ptr.vmem [resolvable:$true] %s467
          %470 = dma.vmem_to_hbm [thread:$0]  %s468, 128, %s465, %s434
        $region44: #{tpu_custom_call.1} parent=27 // pred_fallthru
          _
        // Predicated region
        $region45: #{tpu_custom_call.1} parent=27 // pred_check
          %p471 = pneg %p163
        $region46: #{tpu_custom_call.1} parent=27 // pred_check_branch
          %473 = sbr.rel (%p471) target = $region48
        $region47: #{tpu_custom_call.1} parent=27 // pred_region
          %s475 = ssub.s32 128, 128
          %476 = vsyncadd %s439, %s475
          %s477 = sadd.s32 %s31, %s30
          %s478 = smul.addr %s477, 128
          %s479 = scalar_lea.hbm %s4, %s478
          %s481 = sshll.u32 %s442, 4
          %s482 = int_to_ptr.vmem [resolvable:$true] %s481
          %484 = dma.vmem_to_hbm [thread:$0]  %s482, 128, %s479, %s439
        $region48: #{tpu_custom_call.1} parent=27 // pred_fallthru
          _
      $region28: #{tpu_custom_call.1} parent=5 // pred_fallthru
        _
      %p485 = scmp.le.s32.totalorder 2, %s21
      // Predicated region
      $region49: #{tpu_custom_call.1} parent=5 // pred_check
        %p486 = pneg %p485
      $region50: #{tpu_custom_call.1} parent=5 // pred_check_branch
        %488 = sbr.rel (%p486) target = $region52
      $region51: #{tpu_custom_call.1} parent=5 // pred_region
        %s489 = ssub.s32 %s21, 2
        // Predicated region
        $region53: #{tpu_custom_call.1} parent=51 // pred_check
          %p490 = pneg %p113
        $region54: #{tpu_custom_call.1} parent=51 // pred_check_branch
          %492 = sbr.rel (%p490) target = $region56
        $region55: #{tpu_custom_call.1} parent=51 // pred_region
          %s493 = sand.u32 %s98, 1
          %s494 = scalar_lea.sflag [#allocation4], %s493
          %s495 = sand.u32 %s98, 1
          %s496 = smul.addr %s495, 8
          %s497 = scalar_lea.vmem [#allocation7], %s496
          %498 = dma.done %s494, 128
        $region56: #{tpu_custom_call.1} parent=51 // pred_fallthru
          _
        // Predicated region
        $region57: #{tpu_custom_call.1} parent=51 // pred_check
          %p499 = pneg %p141
        $region58: #{tpu_custom_call.1} parent=51 // pred_check_branch
          %501 = sbr.rel (%p499) target = $region60
        $region59: #{tpu_custom_call.1} parent=51 // pred_region
          %s502 = sand.u32 %s27, 1
          %s503 = scalar_lea.sflag [#allocation9], %s502
          %s504 = sand.u32 %s126, 1
          %s505 = smul.addr %s504, 8
          %s506 = scalar_lea.vmem [#allocation8], %s505
          %507 = dma.done %s503, 128
        $region60: #{tpu_custom_call.1} parent=51 // pred_fallthru
          _
        // Predicated region
        $region61: #{tpu_custom_call.1} parent=51 // pred_check
          %p508 = pneg %p169
        $region62: #{tpu_custom_call.1} parent=51 // pred_check_branch
          %510 = sbr.rel (%p508) target = $region64
        $region63: #{tpu_custom_call.1} parent=51 // pred_region
          %s511 = sand.u32 %s27, 1
          %s512 = scalar_lea.sflag [#allocation9], %s511
          %s513 = sand.u32 %s154, 1
          %s514 = smul.addr %s513, 8
          %s515 = scalar_lea.vmem [#allocation10], %s514
          %516 = dma.done %s512, 128
        $region64: #{tpu_custom_call.1} parent=51 // pred_fallthru
          _
      $region52: #{tpu_custom_call.1} parent=5 // pred_fallthru
        _
    $region6: #{tpu_custom_call.1} parent=1 // loop_footer
      %s25 = sadd.s32 1, %s21
    $region7: #{tpu_custom_call.1} parent=1 // loop_footer_branch
      %20 = sbr.rel target = $region3
    $region8: #{tpu_custom_call.1} parent=1 // loop_exit
      _
    %517 = vsyncpa [#allocation3], 1
    %s518 = scalar_lea.sflag [#allocation3], 1
    %519 = vsyncpa %s518, 1
    %520 = vsyncpa [#allocation6], 1
    %521 = vsyncpa [#allocation4], 1
    %s522 = scalar_lea.sflag [#allocation4], 1
    %523 = vsyncpa %s522, 1
    %524 = vsyncpa [#allocation9], 1
    %s525 = scalar_lea.sflag [#allocation9], 1
    %526 = vsyncpa %s525, 1

</llo_original>
